<compile_context>
chip_gen: v7x
topology: tpu7x:2x2x1
jax: 0.10.0
libtpu: 0.0.40
codegen_flags: <defaults>
</compile_context>

<pallas_src>
import functools
import math

import jax
import jax.numpy as jnp
from jax.experimental import pallas as pl
from jax.experimental.pallas import tpu as pltpu

EPS = 1e-5
SINGLE_K_MAX = 4608   # largest K kept as a single un-tiled reduction block (covers all convs here)
TM_MAX = 256          # max rows per tile
TN_MAX = 256          # max cols per tile (matches v6e/v7x 256-wide MXU)


def _round_up(x, m):
    return -(-x // m) * m


# ----------------------------------------------------------------------------- kernels
def _mm_single_k_kernel(relu, fuse_res, x_ref, w_ref, b_ref, *rest):
    """Whole-K matmul tile with fused bias [+ residual] [+ ReLU] epilogue."""
    if fuse_res:
        r_ref, o_ref = rest
    else:
        (o_ref,) = rest
    y = jnp.dot(x_ref[...], w_ref[...], preferred_element_type=jnp.float32)
    y = y + b_ref[...]
    if fuse_res:
        y = y + r_ref[...].astype(jnp.float32)
    if relu:
        y = jnp.maximum(y, 0.0)
    o_ref[...] = y.astype(o_ref.dtype)


def _mm_multi_k_kernel(relu, fuse_res, x_ref, w_ref, b_ref, *rest):
    """K-tiled matmul with resident f32 accumulator; epilogue on the last K step."""
    if fuse_res:
        r_ref, o_ref, acc_ref = rest
    else:
        o_ref, acc_ref = rest

    @pl.when(pl.program_id(2) == 0)
    def _():
        acc_ref[...] = jnp.zeros_like(acc_ref)

    acc_ref[...] += jnp.dot(x_ref[...], w_ref[...],
                            preferred_element_type=jnp.float32)

    @pl.when(pl.program_id(2) == pl.num_programs(2) - 1)
    def _():
        y = acc_ref[...] + b_ref[...]
        if fuse_res:
            y = y + r_ref[...].astype(jnp.float32)
        if relu:
            y = jnp.maximum(y, 0.0)
        o_ref[...] = y.astype(o_ref.dtype)


# ----------------------------------------------------------------------------- wrapper
@functools.partial(jax.jit, static_argnames=("relu", "out_dtype"))
def matmul_bias(x, w, bias, residual=None, *, relu, out_dtype=jnp.bfloat16):
    """relu_opt(x @ w + bias [+ residual]) — bf16 MXU inputs, f32 accumulation."""
    M, K = x.shape
    _, N = w.shape

    x = x.astype(jnp.bfloat16)
    w = w.astype(jnp.bfloat16)
    bias = bias.reshape(1, N).astype(jnp.float32)

    # ---- tile selection: avoid padding whenever the true dims already line up ----
    if M >= TM_MAX and M % TM_MAX == 0:
        tm = TM_MAX
    elif M >= 128 and M % 128 == 0:
        tm = 128
    else:
        tm = min(128, _round_up(M, 16))     # 16-row alignment for bf16 sublane packing
    Mp = _round_up(M, tm)

    if N % TN_MAX == 0:
        tn = TN_MAX
    elif N % 128 == 0:
        tn = 128
    else:
        tn = N                              # tiny-N layers (64 / 16): full-dim block

    single_k = K <= SINGLE_K_MAX
    if single_k:
        Kp = _round_up(K, 16)               # only conv0's K=147 actually pads
        tk = Kp
    else:
        if K % 2048 == 0:
            tk = 2048
        elif K % 1024 == 0:
            tk = 1024
        else:
            tk = 512
        Kp = _round_up(K, tk)

    # ---- padding (rare: tiny-M late stages, conv0's K) ----
    if (Mp, Kp) != (M, K):
        x = jnp.pad(x, ((0, Mp - M), (0, Kp - K)))
    if Kp != K:
        w = jnp.pad(w, ((0, Kp - K), (0, 0)))
    fuse_res = residual is not None
    if fuse_res and Mp != M:
        residual = jnp.pad(residual, ((0, Mp - M), (0, 0)))

    args = [x, w, bias]
    cost_bytes = (x.size * x.dtype.itemsize + w.size * w.dtype.itemsize
                  + bias.size * 4 + Mp * N * jnp.dtype(out_dtype).itemsize)

    if single_k:
        grid = (Mp // tm, N // tn)
        in_specs = [
            pl.BlockSpec((tm, tk), lambda i, j: (i, 0)),
            pl.BlockSpec((tk, tn), lambda i, j: (0, j)),
            pl.BlockSpec((1, tn), lambda i, j: (0, j)),
        ]
        out_spec = pl.BlockSpec((tm, tn), lambda i, j: (i, j))
        if fuse_res:
            in_specs.append(pl.BlockSpec((tm, tn), lambda i, j: (i, j)))
            args.append(residual)
            cost_bytes += residual.size * residual.dtype.itemsize
        kernel = functools.partial(_mm_single_k_kernel, relu, fuse_res)
        scratch = []
        dims = ("parallel", "parallel")
    else:
        grid = (Mp // tm, N // tn, Kp // tk)
        in_specs = [
            pl.BlockSpec((tm, tk), lambda i, j, k: (i, k)),
            pl.BlockSpec((tk, tn), lambda i, j, k: (k, j)),
            pl.BlockSpec((1, tn), lambda i, j, k: (0, j)),
        ]
        out_spec = pl.BlockSpec((tm, tn), lambda i, j, k: (i, j))
        if fuse_res:
            in_specs.append(pl.BlockSpec((tm, tn), lambda i, j, k: (i, j)))
            args.append(residual)
            cost_bytes += residual.size * residual.dtype.itemsize
        kernel = functools.partial(_mm_multi_k_kernel, relu, fuse_res)
        scratch = [pltpu.VMEM((tm, tn), jnp.float32)]
        dims = ("parallel", "parallel", "arbitrary")

    out = pl.pallas_call(
        kernel,
        out_shape=jax.ShapeDtypeStruct((Mp, N), out_dtype),
        grid=grid,
        in_specs=in_specs,
        out_specs=out_spec,
        scratch_shapes=scratch,
        compiler_params=pltpu.CompilerParams(dimension_semantics=dims),
        cost_estimate=pl.CostEstimate(flops=2 * M * N * K,
                                      bytes_accessed=int(cost_bytes),
                                      transcendentals=0),
    )(*args)
    if Mp != M:
        out = out[:M]
    return out


# ----------------------------------------------------------------------------- glue ops
def im2col(x, k, stride, pad):
    """(N,H,W,C) -> (N*Ho*Wo, k*k*C) patches with (dy, dx, c) ordering."""
    if pad:
        x = jnp.pad(x, ((0, 0), (pad, pad), (pad, pad), (0, 0)))
    N, H, W, C = x.shape
    Ho = (H - k) // stride + 1
    Wo = (W - k) // stride + 1
    cols = []
    for dy in range(k):
        for dx in range(k):
            cols.append(x[:, dy:dy + stride * (Ho - 1) + 1:stride,
                           dx:dx + stride * (Wo - 1) + 1:stride, :])
    patches = jnp.stack(cols, axis=3)  # (N, Ho, Wo, k*k, C)
    return patches.reshape(N * Ho * Wo, k * k * C), (N, Ho, Wo)


def conv_bn(x, cp, relu, residual=None, out_dtype=jnp.bfloat16):
    patches, (N, Ho, Wo) = im2col(x, cp["k"], cp["stride"], cp["pad"])
    if residual is not None:
        residual = residual.reshape(N * Ho * Wo, -1)
    y = matmul_bias(patches, cp["w"], cp["bias"], residual,
                    relu=relu, out_dtype=out_dtype)
    return y.reshape(N, Ho, Wo, -1)


def block_forward(x, bp):
    out = conv_bn(x, bp["conv1"], relu=True)
    out = conv_bn(out, bp["conv2"], relu=True)
    if bp["downsample"] is not None:
        identity = conv_bn(x, bp["downsample"], relu=False)
    else:
        identity = x
    # conv3 + bn3 + residual add + relu fused into a single matmul epilogue
    return conv_bn(out, bp["conv3"], relu=True, residual=identity)


def maxpool_3x3_s2_p1(x):
    # cheap glue (negligible FLOPs): max over 9 shifted strided slices
    N, H, W, C = x.shape
    xp = jnp.pad(x, ((0, 0), (1, 1), (1, 1), (0, 0)),
                 constant_values=float("-inf"))
    Ho = (H + 2 - 3) // 2 + 1
    Wo = (W + 2 - 3) // 2 + 1
    out = None
    for dy in range(3):
        for dx in range(3):
            s = xp[:, dy:dy + 2 * (Ho - 1) + 1:2, dx:dx + 2 * (Wo - 1) + 1:2, :]
            out = s if out is None else jnp.maximum(out, s)
    return out


def adaptive_avg_pool(x, osz=7):
    # torch AdaptiveAvgPool2d bins: [floor(i*H/osz), ceil((i+1)*H/osz))
    N, H, W, C = x.shape
    xf = x.astype(jnp.float32)
    rows = []
    for i in range(osz):
        hs, he = (i * H) // osz, -(-((i + 1) * H) // osz)
        cols = []
        for j in range(osz):
            ws, we = (j * W) // osz, -(-((j + 1) * W) // osz)
            cols.append(jnp.mean(xf[:, hs:he, ws:we, :], axis=(1, 2)))
        rows.append(jnp.stack(cols, axis=1))
    return jnp.stack(rows, axis=1)  # (N, osz, osz, C) f32


# ----------------------------------------------------------------------------- params
class ParamGen:
    def __init__(self, key):
        self._key = key

    def uniform(self, shape, bound):
        self._key, sub = jax.random.split(self._key)
        return jax.random.uniform(sub, shape, jnp.float32, -bound, bound)


def _bn_fold(cout, conv_bias=None):
    # BatchNorm2d defaults: gamma=1, beta=0, running_mean=0, running_var=1
    gamma = jnp.ones((cout,), jnp.float32)
    beta = jnp.zeros((cout,), jnp.float32)
    mean = jnp.zeros((cout,), jnp.float32)
    var = jnp.ones((cout,), jnp.float32)
    scale = gamma / jnp.sqrt(var + EPS)
    bias = beta - mean * scale
    if conv_bias is not None:
        bias = bias + conv_bias * scale  # fold the conv's own bias through BN
    return scale, bias


def make_conv_bn(pg, cin, cout, k, stride, pad, conv_has_bias=False):
    fan_in = cin * k * k
    bound = 1.0 / math.sqrt(fan_in)  # matches torch kaiming_uniform(a=sqrt(5)) bound
    w = pg.uniform((k * k * cin, cout), bound)
    cb = pg.uniform((cout,), bound) if conv_has_bias else None
    scale, bias = _bn_fold(cout, cb)
    # fold the BN scale into the weights and pre-cast to bf16 (MXU-native)
    w = (w * scale[None, :]).astype(jnp.bfloat16)
    return dict(w=w, bias=bias, k=k, stride=stride, pad=pad)


def make_block(pg, cin, mid, stride, with_downsample):
    p = dict(
        conv1=make_conv_bn(pg, cin, mid, 1, stride, 0),
        conv2=make_conv_bn(pg, mid, mid, 3, 1, 1),
        conv3=make_conv_bn(pg, mid, 4 * mid, 1, 1, 0),
        downsample=None,
    )
    if with_downsample:
        # nn.Conv2d default bias=True in the downsample path
        p["downsample"] = make_conv_bn(pg, cin, 4 * mid, 1, stride, 0,
                                       conv_has_bias=True)
    return p


def make_stage(pg, inchannl, stride, num_block):
    blocks = []
    if stride == 1:
        blocks.append(make_block(pg, inchannl, inchannl, 1, True))
    else:
        blocks.append(make_block(pg, inchannl * 2, inchannl, stride, True))
    for _ in range(num_block - 1):
        blocks.append(make_block(pg, inchannl * 4, inchannl, 1, False))
    return blocks


def init_residual_params(key, layers=(3, 4, 6, 3), num_classes=16):
    pg = ParamGen(key)
    params = dict(conv0=make_conv_bn(pg, 3, 64, 7, 2, 3))
    params["stage1"] = make_stage(pg, 64, 1, layers[0])
    params["stage2"] = make_stage(pg, 128, 2, layers[1])
    params["stage3"] = make_stage(pg, 256, 2, layers[2])
    params["stage4"] = make_stage(pg, 512, 2, layers[3])
    fin = 2048 * 7 * 7
    fb = 1.0 / math.sqrt(fin)
    params["fc_w"] = pg.uniform((fin, num_classes), fb).astype(jnp.bfloat16)
    params["fc_b"] = pg.uniform((num_classes,), fb)
    return params


# ----------------------------------------------------------------------------- forward
def residual_forward(params, x_nchw, num_classes):
    x = jnp.transpose(x_nchw, (0, 2, 3, 1)).astype(jnp.bfloat16)  # NCHW -> NHWC, bf16
    x = conv_bn(x, params["conv0"], relu=True)           # conv0 + bn0 + relu
    x = maxpool_3x3_s2_p1(x)                              # pool
    for stage in ("stage1", "stage2", "stage3", "stage4"):
        for bp in params[stage]:
            x = block_forward(x, bp)
    x = adaptive_avg_pool(x, 7)                           # (N, 7, 7, 2048)
    N = x.shape[0]
    # match torch's x.reshape(-1, 2048*7*7) on an NCHW tensor
    feat = jnp.transpose(x, (0, 3, 1, 2)).reshape(N, 2048 * 7 * 7)
    logits = matmul_bias(feat, params["fc_w"], params["fc_b"],
                         relu=False, out_dtype=jnp.float32)
    return logits


if __name__ == "__main__":
    key = jax.random.PRNGKey(0)
    pkey, xkey = jax.random.split(key)
    num_classes = 16  # small, passed to Residual(num_classes=...) equivalently
    params = init_residual_params(pkey, layers=(3, 4, 6, 3),
                                  num_classes=num_classes)
    x = jax.random.normal(xkey, (2, 3, 32, 32), jnp.float32)  # NCHW like PyTorch
    out = residual_forward(params, x, num_classes)
    out = jax.block_until_ready(out)
    assert out.shape == (2, num_classes)
    assert bool(jnp.all(jnp.isfinite(out)))
    print("KERNEL_OK")
</pallas_src>

<mosaic_0001>
module attributes {stable_mosaic.version = 11 : i64} {
  func.func @_mm_single_k_kernel(%arg0: i32, %arg1: i32, %arg2: memref<256x160xbf16, #tpu.memory_space<vmem>>, %arg3: memref<160x64xbf16, #tpu.memory_space<vmem>>, %arg4: memref<1x64xf32, #tpu.memory_space<vmem>>, %arg5: memref<256x64xbf16, #tpu.memory_space<vmem>>) attributes {dimension_semantics = [#tpu.dimension_semantics<parallel>, #tpu.dimension_semantics<parallel>], iteration_bounds = array<i64: 2, 1>, scalar_prefetch = 0 : i64, scratch_operands = 0 : i64, tpu.core_type = #tpu.core_type<tc>, window_params = [{transform_indices = @transform_0, window_bounds = array<i64: 256, 160>}, {transform_indices = @transform_1, window_bounds = array<i64: 160, 64>}, {transform_indices = @transform_2, window_bounds = array<i64: 1, 64>}, {transform_indices = @transform_3, window_bounds = array<i64: 256, 64>}]} {
    %c0 = arith.constant 0 : index
    %c0_0 = arith.constant 0 : index
    %0 = vector.load %arg2[%c0, %c0_0] : memref<256x160xbf16, #tpu.memory_space<vmem>>, vector<256x160xbf16>
    %c0_1 = arith.constant 0 : index
    %c0_2 = arith.constant 0 : index
    %1 = vector.load %arg3[%c0_1, %c0_2] : memref<160x64xbf16, #tpu.memory_space<vmem>>, vector<160x64xbf16>
    %cst = arith.constant dense<0.000000e+00> : vector<256x64xf32>
    %2 = tpu.matmul %0, %1, %cst {dimension_numbers = #tpu.dot_dimension_numbers<[1], [0], [0], [1], [0, 0, 1, 1], [], []>} : vector<256x160xbf16>, vector<160x64xbf16>, vector<256x64xf32> -> vector<256x64xf32>
    %c0_3 = arith.constant 0 : index
    %c0_4 = arith.constant 0 : index
    %3 = vector.load %arg4[%c0_3, %c0_4] : memref<1x64xf32, #tpu.memory_space<vmem>>, vector<1x64xf32>
    %4 = vector.broadcast %3 : vector<1x64xf32> to vector<256x64xf32>
    %5 = arith.addf %2, %4 : vector<256x64xf32>
    %cst_5 = arith.constant 0.000000e+00 : f32
    %6 = vector.broadcast %cst_5 : f32 to vector<256x64xf32>
    %7 = arith.maximumf %5, %6 : vector<256x64xf32>
    %8 = arith.truncf %7 : vector<256x64xf32> to vector<256x64xbf16>
    %c0_6 = arith.constant 0 : index
    %c0_7 = arith.constant 0 : index
    %9 = vector.load %arg5[%c0_6, %c0_7] : memref<256x64xbf16, #tpu.memory_space<vmem>>, vector<256x64xbf16>
    tpu.vector_store %arg5[%c0_6, %c0_7], %8 {strides = array<i32>} : memref<256x64xbf16, #tpu.memory_space<vmem>>, vector<256x64xbf16>,
    return
  }
  func.func @transform_0(%arg0: i32, %arg1: i32) -> (i32, i32) {
    %c0_i32 = arith.constant 0 : i32
    %c0_i32_0 = arith.constant 0 : i32
    return %arg0, %c0_i32 : i32, i32
  }
  func.func @transform_1(%arg0: i32, %arg1: i32) -> (i32, i32) {
    %c0_i32 = arith.constant 0 : i32
    %c0_i32_0 = arith.constant 0 : i32
    return %c0_i32, %arg1 : i32, i32
  }
  func.func @transform_2(%arg0: i32, %arg1: i32) -> (i32, i32) {
    %c0_i32 = arith.constant 0 : i32
    %c0_i32_0 = arith.constant 0 : i32
    return %c0_i32, %arg1 : i32, i32
  }
  func.func @transform_3(%arg0: i32, %arg1: i32) -> (i32, i32) {
    %c0_i32 = arith.constant 0 : i32
    return %arg0, %arg1 : i32, i32
  }
}

</mosaic_0001>

<llo_original>
// kernel: matmul_bias.1
$region0: #{matmul_bias.1}
  #allocation0 [shape = 'u32[]', space=smem, size = 0x4, offset = 0x4, fixed_abs, tag = 'smem constant byte address 0x4 - core index']
  #allocation1 [shape = 'u32[144,128]{1,0:T(1,128)}', space=vmem, size = 0x12000, scoped, tag = 'internal scratch']
  %s0 = inlined_call_operand.vmem [shape: bf16[512,160], index: 0, kind: input, shape index: {}]
  %s1 = inlined_call_operand.vmem [shape: bf16[160,64], index: 1, kind: input, shape index: {}]
  %s2 = inlined_call_operand.vmem [shape: f32[1,64], index: 2, kind: input, shape index: {}]
  %s3 = inlined_call_operand.vmem [shape: bf16[512,64], index: 3, kind: output, shape index: {}]
  %s4 = sld [smem:[#allocation0]]
  $region45: #{matmul_bias.1} parent=0
    _
  %s6 = ssub.s32 1, %s4
  %s7 = scalar_select 0, %s6, %s4
  loop: start=0, step=1, limit=4
  $region2: #{matmul_bias.1} parent=0 // loop_pre_header
    _
  $region3: #{matmul_bias.1} parent=0 // loop_header
    %s9 = sphi 0, %s13
    %p10 = scmp.ge.s32.totalorder %s9, 4
    %s16 = sphi 0, %s28
    %s17 = sphi 0, %s24
    %s18 = sphi 0, %s16
    %s19 = sphi 0, %s17
    %s20 = sphi 0, %s18
    %s21 = sphi 0, %s19
    %s31 = sphi 0, %s33
    %s34 = sphi 0, %s31
    %s35 = sphi 0, %s34
    %s51 = sphi 0, %s35
    %s57 = sphi 0, %s59
    %s60 = sphi 0, %s57
    %s61 = sphi 0, %s60
    %s77 = sphi 0, %s61
    %s83 = sphi 0, %s85
    %s86 = sphi 0, %s83
    %s87 = sphi 0, %s86
    %s103 = sphi 0, %s87
    %s111 = sphi 0, %s113
    %s114 = sphi 0, %s111
    %s115 = sphi 0, %s114
    %s131 = sphi 0, %s115
  $region4: #{matmul_bias.1} parent=0 // loop_header_branch
    %12 = sbr.rel (%p10) target = $region8
  $region5: #{matmul_bias.1} parent=0 // loop_body
    %s14 = ssub.s32 %s9, 1
    %s15 = ssub.s32 %s9, 2
    %s22 = sadd.s32 1, %s17
    %p23 = scmp.ge.s32.totalorder %s22, 1
    %s24 = scalar_select %p23, 0, %s22
    %s25 = sadd.s32 1, %s16
    %s26 = scalar_select %p23, %s25, %s16
    %p27 = scmp.ge.s32.totalorder %s26, 2
    %s28 = scalar_select %p27, 0, %s26
    %s29 = ssub.s32 %s16, %s28
    %p30 = scmp.eq.s32.totalorder %s29, 0
    %s32 = sadd.s32 %s31, 1
    %s33 = scalar_select %p30, %s31, %s32
    %p36 = pneg %p30
    %p37 = scmp.eq.s32.totalorder %s9, 1
    %p38 = por %p36, %p37
    %p39 = scmp.ne.s32.totalorder %s31, %s34
    %p40 = scmp.eq.s32.totalorder %s9, 0
    %p41 = por %p39, %p40
    %p42 = scmp.ne.s32.totalorder %s31, %s34
    %p43 = scmp.eq.s32.totalorder %s14, 1
    %p44 = por %p42, %p43
    %p45 = scmp.ne.s32.totalorder %s34, %s35
    %p46 = scmp.eq.s32.totalorder %s14, 0
    %p47 = por %p45, %p46
    %p48 = scmp.ne.s32.totalorder %s34, %s35
    %p49 = scmp.eq.s32.totalorder %s15, 1
    %p50 = por %p48, %p49
    %p52 = scmp.ne.s32.totalorder %s35, %s51
    %p53 = scmp.eq.s32.totalorder %s15, 0
    %p54 = por %p52, %p53
    %s55 = ssub.s32 %s17, %s24
    %p56 = scmp.eq.s32.totalorder %s55, 0
    %s58 = sadd.s32 %s57, 1
    %s59 = scalar_select %p56, %s57, %s58
    %p62 = pneg %p56
    %p63 = scmp.eq.s32.totalorder %s9, 1
    %p64 = por %p62, %p63
    %p65 = scmp.ne.s32.totalorder %s57, %s60
    %p66 = scmp.eq.s32.totalorder %s9, 0
    %p67 = por %p65, %p66
    %p68 = scmp.ne.s32.totalorder %s57, %s60
    %p69 = scmp.eq.s32.totalorder %s14, 1
    %p70 = por %p68, %p69
    %p71 = scmp.ne.s32.totalorder %s60, %s61
    %p72 = scmp.eq.s32.totalorder %s14, 0
    %p73 = por %p71, %p72
    %p74 = scmp.ne.s32.totalorder %s60, %s61
    %p75 = scmp.eq.s32.totalorder %s15, 1
    %p76 = por %p74, %p75
    %p78 = scmp.ne.s32.totalorder %s61, %s77
    %p79 = scmp.eq.s32.totalorder %s15, 0
    %p80 = por %p78, %p79
    %s81 = ssub.s32 %s17, %s24
    %p82 = scmp.eq.s32.totalorder %s81, 0
    %s84 = sadd.s32 %s83, 1
    %s85 = scalar_select %p82, %s83, %s84
    %p88 = pneg %p82
    %p89 = scmp.eq.s32.totalorder %s9, 1
    %p90 = por %p88, %p89
    %p91 = scmp.ne.s32.totalorder %s83, %s86
    %p92 = scmp.eq.s32.totalorder %s9, 0
    %p93 = por %p91, %p92
    %p94 = scmp.ne.s32.totalorder %s83, %s86
    %p95 = scmp.eq.s32.totalorder %s14, 1
    %p96 = por %p94, %p95
    %p97 = scmp.ne.s32.totalorder %s86, %s87
    %p98 = scmp.eq.s32.totalorder %s14, 0
    %p99 = por %p97, %p98
    %p100 = scmp.ne.s32.totalorder %s86, %s87
    %p101 = scmp.eq.s32.totalorder %s15, 1
    %p102 = por %p100, %p101
    %p104 = scmp.ne.s32.totalorder %s87, %s103
    %p105 = scmp.eq.s32.totalorder %s15, 0
    %p106 = por %p104, %p105
    %s107 = ssub.s32 %s16, %s28
    %s108 = ssub.s32 %s17, %s24
    %s109 = sor.u32 %s107, %s108
    %p110 = scmp.eq.s32.totalorder %s109, 0
    %s112 = sadd.s32 %s111, 1
    %s113 = scalar_select %p110, %s111, %s112
    %p116 = pneg %p110
    %p117 = scmp.eq.s32.totalorder %s9, 1
    %p118 = por %p116, %p117
    %p119 = scmp.ne.s32.totalorder %s111, %s114
    %p120 = scmp.eq.s32.totalorder %s9, 0
    %p121 = por %p119, %p120
    %p122 = scmp.ne.s32.totalorder %s111, %s114
    %p123 = scmp.eq.s32.totalorder %s14, 1
    %p124 = por %p122, %p123
    %p125 = scmp.ne.s32.totalorder %s114, %s115
    %p126 = scmp.eq.s32.totalorder %s14, 0
    %p127 = por %p125, %p126
    %p128 = scmp.ne.s32.totalorder %s114, %s115
    %p129 = scmp.eq.s32.totalorder %s15, 1
    %p130 = por %p128, %p129
    %p132 = scmp.ne.s32.totalorder %s115, %s131
    %p133 = scmp.eq.s32.totalorder %s15, 0
    %p134 = por %p132, %p133
    %p135 = scmp.le.s32.totalorder 1, %s9
    %p136 = scmp.lt.s32.totalorder %s9, 3
    %p137 = pnand %p135, %p136
    %p138 = pneg %p137
    // Predicated region
    $region9: #{matmul_bias.1} parent=5 // pred_check
      _
    $region10: #{matmul_bias.1} parent=5 // pred_check_branch
      %140 = sbr.rel (%p137) target = $region12
    $region11: #{matmul_bias.1} parent=5 // pred_region
      %s141 = ssub.s32 %s9, 1
      // Predicated region
      $region13: #{matmul_bias.1} parent=11 // pred_check
        %p142 = pneg %p73
      $region14: #{matmul_bias.1} parent=11 // pred_check_branch
        %144 = sbr.rel (%p142) target = $region16
      $region15: #{matmul_bias.1} parent=11 // pred_region
        %p145 = scmp.lt.s32.totalorder %s19, 0
        %s146 = scalar_select %p145, %s19, 0
        %s147 = smul.addr %s146, 4
        %s148 = scalar_lea.vmem %s1, %s147
      $region16: #{matmul_bias.1} parent=11 // pred_fallthru
        _
      // Predicated region
      $region17: #{matmul_bias.1} parent=11 // pred_check
        %p149 = pneg %p99
      $region18: #{matmul_bias.1} parent=11 // pred_check_branch
        %151 = sbr.rel (%p149) target = $region20
      $region19: #{matmul_bias.1} parent=11 // pred_region
        %p152 = scmp.lt.s32.totalorder %s19, 0
        %s153 = scalar_select %p152, %s19, 0
        %s154 = scalar_lea.vmem %s2, %s153
      $region20: #{matmul_bias.1} parent=11 // pred_fallthru
        _
    $region12: #{matmul_bias.1} parent=5 // pred_fallthru
      _
    %p155 = scmp.lt.s32.totalorder %s9, 2
    // Predicated region
    $region21: #{matmul_bias.1} parent=5 // pred_check
      %p156 = pneg %p155
    $region22: #{matmul_bias.1} parent=5 // pred_check_branch
      %158 = sbr.rel (%p156) target = $region24
    $region23: #{matmul_bias.1} parent=5 // pred_region
      // Predicated region
      $region25: #{matmul_bias.1} parent=23 // pred_check
        %p159 = pneg %p41
      $region26: #{matmul_bias.1} parent=23 // pred_check_branch
        %161 = sbr.rel (%p159) target = $region28
      $region27: #{matmul_bias.1} parent=23 // pred_region
        %s162 = smul.u32 32, %s16
        %p163 = scmp.lt.s32.totalorder %s162, 63
        %s164 = scalar_select %p163, %s162, 63
        %s165 = smul.addr %s164, 2
        %s166 = smul.addr %s165, 4
        %s167 = scalar_lea.vmem %s0, %s166
        %s168 = smul.u32 32, %s16
      $region28: #{matmul_bias.1} parent=23 // pred_fallthru
        _
    $region24: #{matmul_bias.1} parent=5 // pred_fallthru
      _
    %p169 = scmp.le.s32.totalorder 1, %s9
    %p170 = scmp.lt.s32.totalorder %s9, 3
    %p171 = pnand %p169, %p170
    %p172 = pneg %p171
    // Predicated region
    $region29: #{matmul_bias.1} parent=5 // pred_check
      _
    $region30: #{matmul_bias.1} parent=5 // pred_check_branch
      %174 = sbr.rel (%p171) target = $region32
    $region31: #{matmul_bias.1} parent=5 // pred_region
      %s175 = ssub.s32 %s9, 1
      %s176 = smul.u32 32, %s18
      %p177 = scmp.lt.s32.totalorder %s176, 63
      %s178 = scalar_select %p177, %s176, 63
      %s179 = smul.addr %s178, 2
      %s180 = smul.addr %s179, 4
      %s181 = scalar_lea.vmem %s0, %s180
      %p182 = pneg %p47
      %p183 = pneg %p44
      %p184 = scmp.lt.s32.totalorder %s19, 0
      %s185 = scalar_select %p184, %s19, 0
      %s186 = smul.addr %s185, 4
      %s187 = scalar_lea.vmem %s1, %s186
      %p188 = pneg %p73
      %p189 = pneg %p70
      %p190 = scmp.lt.s32.totalorder %s19, 0
      %s191 = scalar_select %p190, %s19, 0
      %s192 = scalar_lea.vmem %s2, %s191
      %p193 = pneg %p99
      %p194 = pneg %p96
      %p195 = pneg %p127
      %p196 = pneg %p124
      %s197 = smul.u32 32, %s18
      %p198 = scmp.lt.s32.totalorder %s197, 63
      %s199 = scalar_select %p198, %s197, 63
      %p200 = scmp.lt.s32.totalorder %s19, 0
      %s201 = scalar_select %p200, %s19, 0
      %s202 = sadd.s32 %s201, %s199
      %s203 = smul.addr %s202, 4
      %s204 = scalar_lea.vmem %s3, %s203
      %s205 = smul.u32 32, %s18
      %p206 = scmp.lt.s32.totalorder %s205, 63
      %s207 = scalar_select %p206, %s205, 63
      %s208 = smul.addr %s207, 2
      %s209 = smul.addr %s208, 4
      %s210 = scalar_lea.vmem %s0, %s209
      %s211 = smul.u32 32, %s18
      %p212 = scmp.lt.s32.totalorder %s19, 0
      %s213 = scalar_select %p212, %s19, 0
      %s214 = smul.addr %s213, 4
      %s215 = scalar_lea.vmem %s1, %s214
      %p216 = scmp.lt.s32.totalorder %s19, 0
      %s217 = scalar_select %p216, %s19, 0
      %s218 = scalar_lea.vmem %s2, %s217
      %s219 = smul.u32 32, %s18
      %p220 = scmp.lt.s32.totalorder %s219, 63
      %s221 = scalar_select %p220, %s219, 63
      %p222 = scmp.lt.s32.totalorder %s19, 0
      %s223 = scalar_select %p222, %s19, 0
      %s224 = sadd.s32 %s223, %s221
      %s225 = smul.addr %s224, 4
      %s226 = scalar_lea.vmem %s3, %s225
      %s227 = smul.u32 32, %s18
      %v229 = vld [vmem:[%s210] sm:$0xff]
      %v230 = vld [vmem:[%s210 + $0x8] sm:$0xff]
      %v231 = vld [vmem:[%s210 + $0x10] sm:$0xff]
      %v232 = vld [vmem:[%s210 + $0x18] sm:$0xff]
      %v233 = vld [vmem:[%s210 + $0x20] sm:$0xff]
      %v234 = vld [vmem:[%s210 + $0x28] sm:$0xff]
      %v235 = vld [vmem:[%s210 + $0x30] sm:$0xff]
      %v236 = vld [vmem:[%s210 + $0x38] sm:$0xff]
      %v237 = vld [vmem:[%s210 + $0x40] sm:$0xff]
      %v238 = vld [vmem:[%s210 + $0x48] sm:$0xff]
      %v239 = vld [vmem:[%s210 + $0x50] sm:$0xff]
      %v240 = vld [vmem:[%s210 + $0x58] sm:$0xff]
      %v241 = vld [vmem:[%s210 + $0x60] sm:$0xff]
      %v242 = vld [vmem:[%s210 + $0x68] sm:$0xff]
      %v243 = vld [vmem:[%s210 + $0x70] sm:$0xff]
      %v244 = vld [vmem:[%s210 + $0x78] sm:$0xff]
      %v245 = vld [vmem:[%s210 + $0x80] sm:$0xff]
      %v246 = vld [vmem:[%s210 + $0x88] sm:$0xff]
      %v247 = vld [vmem:[%s210 + $0x90] sm:$0xff]
      %v248 = vld [vmem:[%s210 + $0x98] sm:$0xff]
      %v249 = vld [vmem:[%s210 + $0xa0] sm:$0xff]
      %v250 = vld [vmem:[%s210 + $0xa8] sm:$0xff]
      %v251 = vld [vmem:[%s210 + $0xb0] sm:$0xff]
      %v252 = vld [vmem:[%s210 + $0xb8] sm:$0xff]
      %v253 = vld [vmem:[%s210 + $0xc0] sm:$0xff]
      %v254 = vld [vmem:[%s210 + $0xc8] sm:$0xff]
      %v255 = vld [vmem:[%s210 + $0xd0] sm:$0xff]
      %v256 = vld [vmem:[%s210 + $0xd8] sm:$0xff]
      %v257 = vld [vmem:[%s210 + $0xe0] sm:$0xff]
      %v258 = vld [vmem:[%s210 + $0xe8] sm:$0xff]
      %v259 = vld [vmem:[%s210 + $0xf0] sm:$0xff]
      %v260 = vld [vmem:[%s210 + $0xf8] sm:$0xff]
      %v261 = vld [vmem:[%s215] sm:$0xf]
      %v262 = vld [vmem:[%s215 + $0x4] sm:$0xf]
      %v263 = vld [vmem:[%s215 + $0x8] sm:$0xf]
      %v264 = vld [vmem:[%s215 + $0xc] sm:$0xf]
      %v265 = vld [vmem:[%s215 + $0x10] sm:$0xf]
      %v266 = vld [vmem:[%s215 + $0x14] sm:$0xf]
      %v267 = vld [vmem:[%s215 + $0x18] sm:$0xf]
      %v268 = vld [vmem:[%s215 + $0x1c] sm:$0xf]
      %v269 = vld [vmem:[%s215 + $0x20] sm:$0xf]
      %v270 = vld [vmem:[%s215 + $0x24] sm:$0xf]
      %v271 = vld [vmem:[%s215 + $0x28] sm:$0xf]
      %v272 = vld [vmem:[%s215 + $0x2c] sm:$0xf]
      %v273 = vld [vmem:[%s215 + $0x30] sm:$0xf]
      %v274 = vld [vmem:[%s215 + $0x34] sm:$0xf]
      %v275 = vld [vmem:[%s215 + $0x38] sm:$0xf]
      %v276 = vld [vmem:[%s215 + $0x3c] sm:$0xf]
      %v277 = vld [vmem:[%s215 + $0x40] sm:$0xf]
      %v278 = vld [vmem:[%s215 + $0x44] sm:$0xf]
      %v279 = vld [vmem:[%s215 + $0x48] sm:$0xf]
      %v280 = vld [vmem:[%s215 + $0x4c] sm:$0xf]
      %v281 = vld [vmem:[%s218] sm:$0x1]
      %v283 = vlaneseq
      %v284 = vshrl.u32 %v283, 7
      %v285 = vsub.s32 0, %v284
      %v286 = vrot.slane %v281, %v285
      %v320 = vunpack.c.l.b16 %v229
      %v321 = vunpack.c.h.b16 %v229
      %v322 = vunpack.c.l.b16 %v230
      %v323 = vunpack.c.h.b16 %v230
      %v324 = vunpack.c.l.b16 %v231
      %v325 = vunpack.c.h.b16 %v231
      %v326 = vunpack.c.l.b16 %v232
      %v327 = vunpack.c.h.b16 %v232
      %v328 = vunpack.c.l.b16 %v233
      %v329 = vunpack.c.h.b16 %v233
      %v330 = vunpack.c.l.b16 %v234
      %v331 = vunpack.c.h.b16 %v234
      %v332 = vunpack.c.l.b16 %v235
      %v333 = vunpack.c.h.b16 %v235
      %v334 = vunpack.c.l.b16 %v236
      %v335 = vunpack.c.h.b16 %v236
      %v336 = vunpack.c.l.b16 %v237
      %v337 = vunpack.c.h.b16 %v237
      %v338 = vunpack.c.l.b16 %v238
      %v339 = vunpack.c.h.b16 %v238
      %v340 = vunpack.c.l.b16 %v239
      %v341 = vunpack.c.h.b16 %v239
      %v342 = vunpack.c.l.b16 %v240
      %v343 = vunpack.c.h.b16 %v240
      %v344 = vunpack.c.l.b16 %v241
      %v345 = vunpack.c.h.b16 %v241
      %v346 = vunpack.c.l.b16 %v242
      %v347 = vunpack.c.h.b16 %v242
      %v348 = vunpack.c.l.b16 %v243
      %v349 = vunpack.c.h.b16 %v243
      %v350 = vunpack.c.l.b16 %v244
      %v351 = vunpack.c.h.b16 %v244
      %v352 = vunpack.c.l.b16 %v245
      %v353 = vunpack.c.h.b16 %v245
      %v354 = vunpack.c.l.b16 %v246
      %v355 = vunpack.c.h.b16 %v246
      %v356 = vunpack.c.l.b16 %v247
      %v357 = vunpack.c.h.b16 %v247
      %v358 = vunpack.c.l.b16 %v248
      %v359 = vunpack.c.h.b16 %v248
      %v360 = vunpack.c.l.b16 %v249
      %v361 = vunpack.c.h.b16 %v249
      %v362 = vunpack.c.l.b16 %v250
      %v363 = vunpack.c.h.b16 %v250
      %v364 = vunpack.c.l.b16 %v251
      %v365 = vunpack.c.h.b16 %v251
      %v366 = vunpack.c.l.b16 %v252
      %v367 = vunpack.c.h.b16 %v252
      %v368 = vunpack.c.l.b16 %v253
      %v369 = vunpack.c.h.b16 %v253
      %v370 = vunpack.c.l.b16 %v254
      %v371 = vunpack.c.h.b16 %v254
      %v372 = vunpack.c.l.b16 %v255
      %v373 = vunpack.c.h.b16 %v255
      %v374 = vunpack.c.l.b16 %v256
      %v375 = vunpack.c.h.b16 %v256
      %v376 = vunpack.c.l.b16 %v257
      %v377 = vunpack.c.h.b16 %v257
      %v378 = vunpack.c.l.b16 %v258
      %v379 = vunpack.c.h.b16 %v258
      %v380 = vunpack.c.l.b16 %v259
      %v381 = vunpack.c.h.b16 %v259
      %v382 = vunpack.c.l.b16 %v260
      %v383 = vunpack.c.h.b16 %v260
      %v384 = vpack.c.b16 %v322, %v320
      %v385 = vpack.c.b16 %v323, %v321
      %v386 = vpack.c.b16 %v326, %v324
      %v387 = vpack.c.b16 %v327, %v325
      %v388 = vpack.c.b16 %v330, %v328
      %v389 = vpack.c.b16 %v331, %v329
      %v390 = vpack.c.b16 %v334, %v332
      %v391 = vpack.c.b16 %v335, %v333
      %v392 = vpack.c.b16 %v338, %v336
      %v393 = vpack.c.b16 %v339, %v337
      %v394 = vpack.c.b16 %v342, %v340
      %v395 = vpack.c.b16 %v343, %v341
      %v396 = vpack.c.b16 %v346, %v344
      %v397 = vpack.c.b16 %v347, %v345
      %v398 = vpack.c.b16 %v350, %v348
      %v399 = vpack.c.b16 %v351, %v349
      %v400 = vpack.c.b16 %v354, %v352
      %v401 = vpack.c.b16 %v355, %v353
      %v402 = vpack.c.b16 %v358, %v356
      %v403 = vpack.c.b16 %v359, %v357
      %v404 = vpack.c.b16 %v362, %v360
      %v405 = vpack.c.b16 %v363, %v361
      %v406 = vpack.c.b16 %v366, %v364
      %v407 = vpack.c.b16 %v367, %v365
      %v408 = vpack.c.b16 %v370, %v368
      %v409 = vpack.c.b16 %v371, %v369
      %v410 = vpack.c.b16 %v374, %v372
      %v411 = vpack.c.b16 %v375, %v373
      %v412 = vpack.c.b16 %v378, %v376
      %v413 = vpack.c.b16 %v379, %v377
      %v414 = vpack.c.b16 %v382, %v380
      %v415 = vpack.c.b16 %v383, %v381
      %v452 = vunpack.c.l.b16 %v261
      %v453 = vunpack.c.l.b16 %v262
      %v454 = vunpack.c.l.b16 %v263
      %v455 = vunpack.c.l.b16 %v264
      %v456 = vunpack.c.l.b16 %v265
      %v457 = vunpack.c.l.b16 %v266
      %v458 = vunpack.c.l.b16 %v267
      %v459 = vunpack.c.l.b16 %v268
      %v460 = vunpack.c.l.b16 %v269
      %v461 = vunpack.c.l.b16 %v270
      %v462 = vunpack.c.l.b16 %v271
      %v463 = vunpack.c.l.b16 %v272
      %v464 = vunpack.c.l.b16 %v273
      %v465 = vunpack.c.l.b16 %v274
      %v466 = vunpack.c.l.b16 %v275
      %v467 = vunpack.c.l.b16 %v276
      %v468 = vunpack.c.l.b16 %v277
      %v469 = vunpack.c.l.b16 %v278
      %v470 = vunpack.c.l.b16 %v279
      %v471 = vunpack.c.l.b16 %v280
      %v472 = vpack.c.b16 %v453, %v452
      %v473 = vpack.c.b16 %v455, %v454
      %v474 = vpack.c.b16 %v457, %v456
      %v475 = vpack.c.b16 %v459, %v458
      %v476 = vpack.c.b16 %v461, %v460
      %v477 = vpack.c.b16 %v463, %v462
      %v478 = vpack.c.b16 %v465, %v464
      %v479 = vpack.c.b16 %v467, %v466
      %v480 = vpack.c.b16 %v469, %v468
      %v481 = vpack.c.b16 %v471, %v470
      %vm492 = vcmask 261120
      %v494 = vsel %vm492, %v385, 0
      %v497 = vsel %vm492, %v387, 0
      %v500 = vsel %vm492, %v389, 0
      %v503 = vsel %vm492, %v391, 0
      %v506 = vsel %vm492, %v393, 0
      %v509 = vsel %vm492, %v395, 0
      %v512 = vsel %vm492, %v397, 0
      %v515 = vsel %vm492, %v399, 0
      %v518 = vsel %vm492, %v401, 0
      %v521 = vsel %vm492, %v403, 0
      %v524 = vsel %vm492, %v405, 0
      %v527 = vsel %vm492, %v407, 0
      %v530 = vsel %vm492, %v409, 0
      %v533 = vsel %vm492, %v411, 0
      %v536 = vsel %vm492, %v413, 0
      %v539 = vsel %vm492, %v415, 0
      %541 = vmatprep.subr.bf16.mxu0 0
      %542 = vmatpush1.bf16.msra.mxu0 %v472
      %543 = vmatprep.subr.bf16.mxu0 0
      %544 = vmatpush1.bf16.msra.mxu0 %v473
      %545 = vmatprep.subr.bf16.mxu0 0
      %546 = vmatpush1.bf16.msra.mxu0 %v474
      %547 = vmatprep.subr.bf16.mxu0 0
      %548 = vmatpush1.bf16.msra.mxu0 %v475
      %549 = vmatprep.subr.bf16.mxu0 0
      %550 = vmatpush1.bf16.msra.mxu0 %v476
      %551 = vmatprep.subr.bf16.mxu0 0
      %552 = vmatpush1.bf16.msra.mxu0 %v477
      %553 = vmatprep.subr.bf16.mxu0 0
      %554 = vmatpush1.bf16.msra.mxu0 %v478
      %555 = vmatprep.subr.bf16.mxu0 0
      %556 = vmatpush1.bf16.msra.mxu0 %v479
      %557 = vmatprep.subr.bf16.mxu0 0
      %558 = vmatpush1.bf16.msra.mxu0 %v480
      %559 = vmatprep.subr.bf16.mxu0 0
      %560 = vmatpush1.bf16.msra.mxu0 %v481
      %561 = vmatprep.subr.bf16.mxu0 0
      %562 = vmatpush1.bf16.msra.mxu0 0
      %563 = vmatprep.subr.bf16.mxu0 0
      %564 = vmatpush1.bf16.msra.mxu0 0
      %565 = vmatprep.subr.bf16.mxu0 0
      %566 = vmatpush1.bf16.msra.mxu0 0
      %567 = vmatprep.subr.bf16.mxu0 0
      %568 = vmatpush1.bf16.msra.mxu0 0
      %569 = vmatprep.subr.bf16.mxu0 0
      %570 = vmatpush1.bf16.msra.mxu0 0
      %571 = vmatprep.subr.bf16.mxu0 0
      %572 = vmatpush1.bf16.msra.mxu0 0
      %573 = vmatprep.mubr.bf16.mxu0 %v494
      %574 = vmatmul.mubr.bf16.gmra.mrb[0].mxu0 %v384
      %v575 = vpop.f32.mrb[0].mxu0
      %v576 = vadd.f32 %v286, %v575
      %v577 = vpop.f32.mrb[0].mxu0
      %v578 = vpop.f32.mrb[0].mxu0
      %v579 = vadd.f32 %v286, %v578
      %v580 = vpop.f32.mrb[0].mxu0
      %581 = vmatprep.mubr.bf16.mxu0 %v497
      %582 = vmatmul.mubr.bf16.gmra.mrb[0].mxu0 %v386
      %v583 = vpop.f32.mrb[0].mxu0
      %v584 = vadd.f32 %v286, %v583
      %v585 = vpop.f32.mrb[0].mxu0
      %v586 = vpop.f32.mrb[0].mxu0
      %v587 = vadd.f32 %v286, %v586
      %v588 = vpop.f32.mrb[0].mxu0
      %589 = vmatprep.mubr.bf16.mxu0 %v500
      %590 = vmatmul.mubr.bf16.gmra.mrb[0].mxu0 %v388
      %v591 = vpop.f32.mrb[0].mxu0
      %v592 = vadd.f32 %v286, %v591
      %v593 = vpop.f32.mrb[0].mxu0
      %v594 = vpop.f32.mrb[0].mxu0
      %v595 = vadd.f32 %v286, %v594
      %v596 = vpop.f32.mrb[0].mxu0
      %597 = vmatprep.mubr.bf16.mxu0 %v503
      %598 = vmatmul.mubr.bf16.gmra.mrb[0].mxu0 %v390
      %v599 = vpop.f32.mrb[0].mxu0
      %v600 = vadd.f32 %v286, %v599
      %v601 = vpop.f32.mrb[0].mxu0
      %v602 = vpop.f32.mrb[0].mxu0
      %v603 = vadd.f32 %v286, %v602
      %v604 = vpop.f32.mrb[0].mxu0
      %605 = vmatprep.mubr.bf16.mxu0 %v506
      %606 = vmatmul.mubr.bf16.gmra.mrb[0].mxu0 %v392
      %v607 = vpop.f32.mrb[0].mxu0
      %v608 = vadd.f32 %v286, %v607
      %v609 = vpop.f32.mrb[0].mxu0
      %v610 = vpop.f32.mrb[0].mxu0
      %v611 = vadd.f32 %v286, %v610
      %v612 = vpop.f32.mrb[0].mxu0
      %613 = vmatprep.mubr.bf16.mxu0 %v509
      %614 = vmatmul.mubr.bf16.gmra.mrb[0].mxu0 %v394
      %v615 = vpop.f32.mrb[0].mxu0
      %v616 = vadd.f32 %v286, %v615
      %v617 = vpop.f32.mrb[0].mxu0
      %v618 = vpop.f32.mrb[0].mxu0
      %v619 = vadd.f32 %v286, %v618
      %v620 = vpop.f32.mrb[0].mxu0
      %621 = vmatprep.mubr.bf16.mxu0 %v512
      %622 = vmatmul.mubr.bf16.gmra.mrb[0].mxu0 %v396
      %v623 = vpop.f32.mrb[0].mxu0
      %v624 = vadd.f32 %v286, %v623
      %v625 = vpop.f32.mrb[0].mxu0
      %v626 = vpop.f32.mrb[0].mxu0
      %v627 = vadd.f32 %v286, %v626
      %v628 = vpop.f32.mrb[0].mxu0
      %629 = vmatprep.mubr.bf16.mxu0 %v515
      %630 = vmatmul.mubr.bf16.gmra.mrb[0].mxu0 %v398
      %v631 = vpop.f32.mrb[0].mxu0
      %v632 = vadd.f32 %v286, %v631
      %v633 = vpop.f32.mrb[0].mxu0
      %v634 = vpop.f32.mrb[0].mxu0
      %v635 = vadd.f32 %v286, %v634
      %v636 = vpop.f32.mrb[0].mxu0
      %637 = vmatprep.mubr.bf16.mxu0 %v518
      %638 = vmatmul.mubr.bf16.gmra.mrb[0].mxu0 %v400
      %v639 = vpop.f32.mrb[0].mxu0
      %v640 = vadd.f32 %v286, %v639
      %v641 = vpop.f32.mrb[0].mxu0
      %v642 = vpop.f32.mrb[0].mxu0
      %v643 = vadd.f32 %v286, %v642
      %v644 = vpop.f32.mrb[0].mxu0
      %645 = vmatprep.mubr.bf16.mxu0 %v521
      %646 = vmatmul.mubr.bf16.gmra.mrb[0].mxu0 %v402
      %v647 = vpop.f32.mrb[0].mxu0
      %v648 = vadd.f32 %v286, %v647
      %v649 = vpop.f32.mrb[0].mxu0
      %v650 = vpop.f32.mrb[0].mxu0
      %v651 = vadd.f32 %v286, %v650
      %v652 = vpop.f32.mrb[0].mxu0
      %653 = vmatprep.mubr.bf16.mxu0 %v524
      %654 = vmatmul.mubr.bf16.gmra.mrb[0].mxu0 %v404
      %v655 = vpop.f32.mrb[0].mxu0
      %v656 = vadd.f32 %v286, %v655
      %v657 = vpop.f32.mrb[0].mxu0
      %v658 = vpop.f32.mrb[0].mxu0
      %v659 = vadd.f32 %v286, %v658
      %v660 = vpop.f32.mrb[0].mxu0
      %661 = vmatprep.mubr.bf16.mxu0 %v527
      %662 = vmatmul.mubr.bf16.gmra.mrb[0].mxu0 %v406
      %v663 = vpop.f32.mrb[0].mxu0
      %v664 = vadd.f32 %v286, %v663
      %v665 = vpop.f32.mrb[0].mxu0
      %v666 = vpop.f32.mrb[0].mxu0
      %v667 = vadd.f32 %v286, %v666
      %v668 = vpop.f32.mrb[0].mxu0
      %669 = vmatprep.mubr.bf16.mxu0 %v530
      %670 = vmatmul.mubr.bf16.gmra.mrb[0].mxu0 %v408
      %v671 = vpop.f32.mrb[0].mxu0
      %v672 = vadd.f32 %v286, %v671
      %v673 = vpop.f32.mrb[0].mxu0
      %v674 = vpop.f32.mrb[0].mxu0
      %v675 = vadd.f32 %v286, %v674
      %v676 = vpop.f32.mrb[0].mxu0
      %677 = vmatprep.mubr.bf16.mxu0 %v533
      %678 = vmatmul.mubr.bf16.gmra.mrb[0].mxu0 %v410
      %v679 = vpop.f32.mrb[0].mxu0
      %v680 = vadd.f32 %v286, %v679
      %v681 = vpop.f32.mrb[0].mxu0
      %v682 = vpop.f32.mrb[0].mxu0
      %v683 = vadd.f32 %v286, %v682
      %v684 = vpop.f32.mrb[0].mxu0
      %685 = vmatprep.mubr.bf16.mxu0 %v536
      %686 = vmatmul.mubr.bf16.gmra.mrb[0].mxu0 %v412
      %v687 = vpop.f32.mrb[0].mxu0
      %v688 = vadd.f32 %v286, %v687
      %v689 = vpop.f32.mrb[0].mxu0
      %v690 = vpop.f32.mrb[0].mxu0
      %v691 = vadd.f32 %v286, %v690
      %v692 = vpop.f32.mrb[0].mxu0
      %693 = vmatprep.mubr.bf16.mxu0 %v539
      %694 = vmatmul.mubr.bf16.gmra.mrb[0].mxu0 %v414
      %v695 = vpop.f32.mrb[0].mxu0
      %v696 = vadd.f32 %v286, %v695
      %v697 = vpop.f32.mrb[0].mxu0
      %v698 = vpop.f32.mrb[0].mxu0
      %v699 = vadd.f32 %v286, %v698
      %v700 = vpop.f32.mrb[0].mxu0
      %701 = vdwg.mxu0
      %v702 = vmax.f32 %v576, 0.0
      %v703 = vmax.f32 %v579, 0.0
      %v704 = vmax.f32 %v584, 0.0
      %v705 = vmax.f32 %v587, 0.0
      %v706 = vmax.f32 %v592, 0.0
      %v707 = vmax.f32 %v595, 0.0
      %v708 = vmax.f32 %v600, 0.0
      %v709 = vmax.f32 %v603, 0.0
      %v710 = vmax.f32 %v608, 0.0
      %v711 = vmax.f32 %v611, 0.0
      %v712 = vmax.f32 %v616, 0.0
      %v713 = vmax.f32 %v619, 0.0
      %v714 = vmax.f32 %v624, 0.0
      %v715 = vmax.f32 %v627, 0.0
      %v716 = vmax.f32 %v632, 0.0
      %v717 = vmax.f32 %v635, 0.0
      %v718 = vmax.f32 %v640, 0.0
      %v719 = vmax.f32 %v643, 0.0
      %v720 = vmax.f32 %v648, 0.0
      %v721 = vmax.f32 %v651, 0.0
      %v722 = vmax.f32 %v656, 0.0
      %v723 = vmax.f32 %v659, 0.0
      %v724 = vmax.f32 %v664, 0.0
      %v725 = vmax.f32 %v667, 0.0
      %v726 = vmax.f32 %v672, 0.0
      %v727 = vmax.f32 %v675, 0.0
      %v728 = vmax.f32 %v680, 0.0
      %v729 = vmax.f32 %v683, 0.0
      %v730 = vmax.f32 %v688, 0.0
      %v731 = vmax.f32 %v691, 0.0
      %v732 = vmax.f32 %v696, 0.0
      %v733 = vmax.f32 %v699, 0.0
      %v734 = vpack.c.bf16 %v703, %v702
      %v735 = vpack.c.bf16 %v705, %v704
      %v736 = vpack.c.bf16 %v707, %v706
      %v737 = vpack.c.bf16 %v709, %v708
      %v738 = vpack.c.bf16 %v711, %v710
      %v739 = vpack.c.bf16 %v713, %v712
      %v740 = vpack.c.bf16 %v715, %v714
      %v741 = vpack.c.bf16 %v717, %v716
      %v742 = vpack.c.bf16 %v719, %v718
      %v743 = vpack.c.bf16 %v721, %v720
      %v744 = vpack.c.bf16 %v723, %v722
      %v745 = vpack.c.bf16 %v725, %v724
      %v746 = vpack.c.bf16 %v727, %v726
      %v747 = vpack.c.bf16 %v729, %v728
      %v748 = vpack.c.bf16 %v731, %v730
      %v749 = vpack.c.bf16 %v733, %v732
      %v766 = vunpack.c.l.b16 %v734
      %v767 = vunpack.c.h.b16 %v734
      %v768 = vunpack.c.l.b16 %v735
      %v769 = vunpack.c.h.b16 %v735
      %v770 = vunpack.c.l.b16 %v736
      %v771 = vunpack.c.h.b16 %v736
      %v772 = vunpack.c.l.b16 %v737
      %v773 = vunpack.c.h.b16 %v737
      %v774 = vunpack.c.l.b16 %v738
      %v775 = vunpack.c.h.b16 %v738
      %v776 = vunpack.c.l.b16 %v739
      %v777 = vunpack.c.h.b16 %v739
      %v778 = vunpack.c.l.b16 %v740
      %v779 = vunpack.c.h.b16 %v740
      %v780 = vunpack.c.l.b16 %v741
      %v781 = vunpack.c.h.b16 %v741
      %v782 = vunpack.c.l.b16 %v742
      %v783 = vunpack.c.h.b16 %v742
      %v784 = vunpack.c.l.b16 %v743
      %v785 = vunpack.c.h.b16 %v743
      %v786 = vunpack.c.l.b16 %v744
      %v787 = vunpack.c.h.b16 %v744
      %v788 = vunpack.c.l.b16 %v745
      %v789 = vunpack.c.h.b16 %v745
      %v790 = vunpack.c.l.b16 %v746
      %v791 = vunpack.c.h.b16 %v746
      %v792 = vunpack.c.l.b16 %v747
      %v793 = vunpack.c.h.b16 %v747
      %v794 = vunpack.c.l.b16 %v748
      %v795 = vunpack.c.h.b16 %v748
      %v796 = vunpack.c.l.b16 %v749
      %v797 = vunpack.c.h.b16 %v749
      %v798 = vpack.c.b16 %v766, %v766
      %v799 = vpack.c.b16 %v767, %v767
      %v800 = vpack.c.b16 %v768, %v768
      %v801 = vpack.c.b16 %v769, %v769
      %v802 = vpack.c.b16 %v770, %v770
      %v803 = vpack.c.b16 %v771, %v771
      %v804 = vpack.c.b16 %v772, %v772
      %v805 = vpack.c.b16 %v773, %v773
      %v806 = vpack.c.b16 %v774, %v774
      %v807 = vpack.c.b16 %v775, %v775
      %v808 = vpack.c.b16 %v776, %v776
      %v809 = vpack.c.b16 %v777, %v777
      %v810 = vpack.c.b16 %v778, %v778
      %v811 = vpack.c.b16 %v779, %v779
      %v812 = vpack.c.b16 %v780, %v780
      %v813 = vpack.c.b16 %v781, %v781
      %v814 = vpack.c.b16 %v782, %v782
      %v815 = vpack.c.b16 %v783, %v783
      %v816 = vpack.c.b16 %v784, %v784
      %v817 = vpack.c.b16 %v785, %v785
      %v818 = vpack.c.b16 %v786, %v786
      %v819 = vpack.c.b16 %v787, %v787
      %v820 = vpack.c.b16 %v788, %v788
      %v821 = vpack.c.b16 %v789, %v789
      %v822 = vpack.c.b16 %v790, %v790
      %v823 = vpack.c.b16 %v791, %v791
      %v824 = vpack.c.b16 %v792, %v792
      %v825 = vpack.c.b16 %v793, %v793
      %v826 = vpack.c.b16 %v794, %v794
      %v827 = vpack.c.b16 %v795, %v795
      %v828 = vpack.c.b16 %v796, %v796
      %v829 = vpack.c.b16 %v797, %v797
      %vm862 = vcmask 519168
      %863 = vst.msk [vmem:[%s226] sm:$0xf] %vm862, %v798
      %864 = vst.msk [vmem:[%s226 + $0x4] sm:$0xf] %vm862, %v799
      %865 = vst.msk [vmem:[%s226 + $0x8] sm:$0xf] %vm862, %v800
      %866 = vst.msk [vmem:[%s226 + $0xc] sm:$0xf] %vm862, %v801
      %867 = vst.msk [vmem:[%s226 + $0x10] sm:$0xf] %vm862, %v802
      %868 = vst.msk [vmem:[%s226 + $0x14] sm:$0xf] %vm862, %v803
      %869 = vst.msk [vmem:[%s226 + $0x18] sm:$0xf] %vm862, %v804
      %870 = vst.msk [vmem:[%s226 + $0x1c] sm:$0xf] %vm862, %v805
      %871 = vst.msk [vmem:[%s226 + $0x20] sm:$0xf] %vm862, %v806
      %872 = vst.msk [vmem:[%s226 + $0x24] sm:$0xf] %vm862, %v807
      %873 = vst.msk [vmem:[%s226 + $0x28] sm:$0xf] %vm862, %v808
      %874 = vst.msk [vmem:[%s226 + $0x2c] sm:$0xf] %vm862, %v809
      %875 = vst.msk [vmem:[%s226 + $0x30] sm:$0xf] %vm862, %v810
      %876 = vst.msk [vmem:[%s226 + $0x34] sm:$0xf] %vm862, %v811
      %877 = vst.msk [vmem:[%s226 + $0x38] sm:$0xf] %vm862, %v812
      %878 = vst.msk [vmem:[%s226 + $0x3c] sm:$0xf] %vm862, %v813
      %879 = vst.msk [vmem:[%s226 + $0x40] sm:$0xf] %vm862, %v814
      %880 = vst.msk [vmem:[%s226 + $0x44] sm:$0xf] %vm862, %v815
      %881 = vst.msk [vmem:[%s226 + $0x48] sm:$0xf] %vm862, %v816
      %882 = vst.msk [vmem:[%s226 + $0x4c] sm:$0xf] %vm862, %v817
      %883 = vst.msk [vmem:[%s226 + $0x50] sm:$0xf] %vm862, %v818
      %884 = vst.msk [vmem:[%s226 + $0x54] sm:$0xf] %vm862, %v819
      %885 = vst.msk [vmem:[%s226 + $0x58] sm:$0xf] %vm862, %v820
      %886 = vst.msk [vmem:[%s226 + $0x5c] sm:$0xf] %vm862, %v821
      %887 = vst.msk [vmem:[%s226 + $0x60] sm:$0xf] %vm862, %v822
      %888 = vst.msk [vmem:[%s226 + $0x64] sm:$0xf] %vm862, %v823
      %889 = vst.msk [vmem:[%s226 + $0x68] sm:$0xf] %vm862, %v824
      %890 = vst.msk [vmem:[%s226 + $0x6c] sm:$0xf] %vm862, %v825
      %891 = vst.msk [vmem:[%s226 + $0x70] sm:$0xf] %vm862, %v826
      %892 = vst.msk [vmem:[%s226 + $0x74] sm:$0xf] %vm862, %v827
      %893 = vst.msk [vmem:[%s226 + $0x78] sm:$0xf] %vm862, %v828
      %894 = vst.msk [vmem:[%s226 + $0x7c] sm:$0xf] %vm862, %v829
      %s895 = smul.u32 32, %s18
      %p896 = scmp.lt.s32.totalorder %s895, 63
      %s897 = scalar_select %p896, %s895, 63
      %p898 = scmp.lt.s32.totalorder %s19, 0
      %s899 = scalar_select %p898, %s19, 0
      %s900 = sadd.s32 %s899, %s897
      %s901 = smul.addr %s900, 4
      %s902 = scalar_lea.vmem %s3, %s901
      // Predicated region
      $region33: #{matmul_bias.1} parent=31 // pred_check
        %p903 = pneg %p124
      $region34: #{matmul_bias.1} parent=31 // pred_check_branch
        %905 = sbr.rel (%p903) target = $region36
      $region35: #{matmul_bias.1} parent=31 // pred_region
        %s906 = smul.u32 32, %s18
      $region36: #{matmul_bias.1} parent=31 // pred_fallthru
        _
    $region32: #{matmul_bias.1} parent=5 // pred_fallthru
      _
    %p907 = scmp.le.s32.totalorder 2, %s9
    // Predicated region
    $region37: #{matmul_bias.1} parent=5 // pred_check
      %p908 = pneg %p907
    $region38: #{matmul_bias.1} parent=5 // pred_check_branch
      %910 = sbr.rel (%p908) target = $region40
    $region39: #{matmul_bias.1} parent=5 // pred_region
      %s911 = ssub.s32 %s9, 2
      // Predicated region
      $region41: #{matmul_bias.1} parent=39 // pred_check
        %p912 = pneg %p130
      $region42: #{matmul_bias.1} parent=39 // pred_check_branch
        %914 = sbr.rel (%p912) target = $region44
      $region43: #{matmul_bias.1} parent=39 // pred_region
        %s915 = smul.u32 32, %s20
        %p916 = scmp.lt.s32.totalorder %s915, 63
        %s917 = scalar_select %p916, %s915, 63
        %p918 = scmp.lt.s32.totalorder %s21, 0
        %s919 = scalar_select %p918, %s21, 0
        %s920 = sadd.s32 %s919, %s917
        %s921 = smul.addr %s920, 4
        %s922 = scalar_lea.vmem %s3, %s921
      $region44: #{matmul_bias.1} parent=39 // pred_fallthru
        _
    $region40: #{matmul_bias.1} parent=5 // pred_fallthru
      _
  $region6: #{matmul_bias.1} parent=0 // loop_footer
    %s13 = sadd.s32 1, %s9
  $region7: #{matmul_bias.1} parent=0 // loop_footer_branch
    %8 = sbr.rel target = $region3
  $region8: #{matmul_bias.1} parent=0 // loop_exit
    _

</llo_original>
